<compile_context>
chip_gen: v7x
topology: tpu7x:2x2x1
jax: 0.10.0
libtpu: 0.0.40
codegen_flags: <defaults>
</compile_context>

<pallas_src>
import jax
import jax.numpy as jnp
from jax import lax
from jax.experimental import pallas as pl
from jax.experimental.pallas import tpu as pltpu

TEMP = 0.05            # self.temp = 0.05 (overrides the 0.07 constructor default)
INV_TEMP = 1.0 / TEMP


# ----------------------------------------------------------------------------
# Fused kernel: proj + normalize (both modalities) -> sim -> bidirectional ITA loss
# ----------------------------------------------------------------------------
def _albef_ita_kernel(img_ref, txt_ref, vw_ref, vb_ref, tw_ref, tb_ref, o_ref):
    B = img_ref.shape[0]
    inv_b = 1.0 / float(B)

    # ---- projections: x @ W.T + b, with W in PyTorch (out, in) layout ----
    # contract x dim 1 with W dim 1 -> (B, D); MXU consumes the transposed operand natively.
    iy = lax.dot_general(
        img_ref[...], vw_ref[...],
        dimension_numbers=(((1,), (1,)), ((), ())),
        preferred_element_type=jnp.float32,
    ) + vb_ref[...]
    ty = lax.dot_general(
        txt_ref[...], tw_ref[...],
        dimension_numbers=(((1,), (1,)), ((), ())),
        preferred_element_type=jnp.float32,
    ) + tb_ref[...]

    # ---- F.normalize(dim=-1): x / max(||x||, 1e-12) == x * rsqrt(max(||x||^2, 1e-24)) ----
    # rsqrt lands in the EUP slot (idle here) instead of a VALU divide.
    i_feat = iy * lax.rsqrt(jnp.maximum(jnp.sum(iy * iy, axis=-1, keepdims=True), 1e-24))
    t_feat = ty * lax.rsqrt(jnp.maximum(jnp.sum(ty * ty, axis=-1, keepdims=True), 1e-24))

    # Fold 1/temp into the image features once (B*D mults, not B^2 divides).
    i_scaled = i_feat * INV_TEMP

    # ---- similarity matrices (both orientations, so every reduction is lane-axis) ----
    sim = lax.dot_general(          # (B, B)  == image_feat @ text_feat.T / temp
        i_scaled, t_feat,
        dimension_numbers=(((1,), (1,)), ((), ())),
        preferred_element_type=jnp.float32,
    )
    sim_t = lax.dot_general(        # (B, B)  == sim.T, via a second (cheap) MXU matmul
        t_feat, i_scaled,
        dimension_numbers=(((1,), (1,)), ((), ())),
        preferred_element_type=jnp.float32,
    )

    # ---- loss with targets == eye(B) ----
    # loss_i2t = -mean_i [sim[i,i] - lse(sim[i,:])]
    # loss_t2i = -mean_j [sim[j,j] - lse(sim[:,j])]   (lse over rows of sim_t)
    # loss_ita = -mean(diag) + 0.5*(mean(lse_rows) + mean(lse_cols))
    m1 = jnp.max(sim, axis=-1, keepdims=True)
    lse1 = m1 + jnp.log(jnp.sum(jnp.exp(sim - m1), axis=-1, keepdims=True))      # (B, 1)
    m0 = jnp.max(sim_t, axis=-1, keepdims=True)
    lse0 = m0 + jnp.log(jnp.sum(jnp.exp(sim_t - m0), axis=-1, keepdims=True))    # (B, 1)

    # diag(sim)[i] = sum_d i_scaled[i,d] * t_feat[i,d]  (lane reduce, no (B,B) gather)
    diag = jnp.sum(i_scaled * t_feat, axis=-1, keepdims=True)                    # (B, 1)

    # Keep everything 2-D: sublane-reduce the (B,1) columns to (1,1) and store as a tile.
    mean_diag = jnp.sum(diag, axis=0, keepdims=True) * inv_b
    mean_lse1 = jnp.sum(lse1, axis=0, keepdims=True) * inv_b
    mean_lse0 = jnp.sum(lse0, axis=0, keepdims=True) * inv_b
    o_ref[...] = -mean_diag + 0.5 * (mean_lse1 + mean_lse0)


def albef_ita_loss(img_cls, txt_cls, params):
    """img_cls: (B, Wv) f32; txt_cls: (B, Wt) f32; weights in PyTorch Linear layout."""
    B, Wv = img_cls.shape
    _, Wt = txt_cls.shape
    vw = params["vision_proj_w"]        # (D, Wv)
    tw = params["text_proj_w"]          # (D, Wt)
    D = vw.shape[0]
    vb = params["vision_proj_b"].reshape(1, D)
    tb = params["text_proj_b"].reshape(1, D)

    vmem = pl.BlockSpec(memory_space=pltpu.MemorySpace.VMEM)
    out = pl.pallas_call(
        _albef_ita_kernel,
        out_shape=jax.ShapeDtypeStruct((1, 1), jnp.float32),
        in_specs=[vmem, vmem, vmem, vmem, vmem, vmem],
        out_specs=vmem,
    )(img_cls, txt_cls, vw, vb, tw, tb)
    return out[0, 0]


# ----------------------------------------------------------------------------
# ALBEF forward (contrastive head); encoders are external -> their outputs are inputs.
# ----------------------------------------------------------------------------
def albef_forward(image_embeds, text_embeds, params):
    # take the CLS token (position 0) -- glue
    img_cls = image_embeds[:, 0, :]     # (B, vision_width)
    txt_cls = text_embeds[:, 0, :]      # (B, text_width)

    # AllGather with world_size == 1 is the identity (features stay local).
    loss = albef_ita_loss(img_cls, txt_cls, params)
    return {"loss_ita": loss}


# ----------------------------------------------------------------------------
# Pure-JAX reference (for a correctness spot-check)
# ----------------------------------------------------------------------------
def albef_reference(image_embeds, text_embeds, params):
    def proj_norm(x, w, b):
        y = x @ w.T + b
        n = jnp.sqrt(jnp.sum(y * y, axis=-1, keepdims=True))
        return y / jnp.maximum(n, 1e-12)

    i_f = proj_norm(image_embeds[:, 0, :], params["vision_proj_w"], params["vision_proj_b"])
    t_f = proj_norm(text_embeds[:, 0, :], params["text_proj_w"], params["text_proj_b"])
    sim = i_f @ t_f.T / TEMP
    tgt = jnp.eye(sim.shape[0], dtype=jnp.float32)
    li2t = -jnp.mean(jnp.sum(jax.nn.log_softmax(sim, axis=1) * tgt, axis=1))
    lt2i = -jnp.mean(jnp.sum(jax.nn.log_softmax(sim, axis=0) * tgt, axis=0))
    return (li2t + lt2i) / 2.0


if __name__ == "__main__":
    key = jax.random.PRNGKey(0)
    k1, k2, k3, k4, k5, k6 = jax.random.split(key, 6)

    # Small shapes consistent with the module structure
    B = 8              # batch
    L_IMG = 17         # 16 patches + CLS
    L_TXT = 8          # text sequence length
    VISION_WIDTH = 32  # stands in for 768
    TEXT_WIDTH = 32    # stands in for 768
    EMBED_DIM = 32     # config['embed_dim']

    # Deterministic synthetic encoder outputs
    image_embeds = jax.random.normal(k1, (B, L_IMG, VISION_WIDTH), dtype=jnp.float32)
    text_embeds = jax.random.normal(k2, (B, L_TXT, TEXT_WIDTH), dtype=jnp.float32)

    # Deterministic parameter init (nn.Linear shapes: weight (out, in), bias (out,))
    params = {
        "vision_proj_w": 0.02 * jax.random.normal(k3, (EMBED_DIM, VISION_WIDTH), dtype=jnp.float32),
        "vision_proj_b": 0.01 * jax.random.normal(k4, (EMBED_DIM,), dtype=jnp.float32),
        "text_proj_w": 0.02 * jax.random.normal(k5, (EMBED_DIM, TEXT_WIDTH), dtype=jnp.float32),
        "text_proj_b": 0.01 * jax.random.normal(k6, (EMBED_DIM,), dtype=jnp.float32),
    }

    out = albef_forward(image_embeds, text_embeds, params)
    loss = jax.block_until_ready(out["loss_ita"])

    ref = jax.block_until_ready(albef_reference(image_embeds, text_embeds, params))
    assert jnp.allclose(loss, ref, atol=1e-4, rtol=1e-4), (loss, ref)

    print("KERNEL_OK")
</pallas_src>

<mosaic_0001>
module attributes {stable_mosaic.version = 11 : i64} {
  func.func @_albef_ita_kernel(%arg0: memref<8x32xf32, #tpu.memory_space<vmem>>, %arg1: memref<8x32xf32, #tpu.memory_space<vmem>>, %arg2: memref<32x32xf32, #tpu.memory_space<vmem>>, %arg3: memref<1x32xf32, #tpu.memory_space<vmem>>, %arg4: memref<32x32xf32, #tpu.memory_space<vmem>>, %arg5: memref<1x32xf32, #tpu.memory_space<vmem>>, %arg6: memref<1x1xf32, #tpu.memory_space<vmem>>) attributes {dimension_semantics = [], scalar_prefetch = 0 : i64, scratch_operands = 0 : i64, tpu.core_type = #tpu.core_type<tc>} {
    %c0 = arith.constant 0 : index
    %c0_0 = arith.constant 0 : index
    %0 = vector.load %arg0[%c0, %c0_0] : memref<8x32xf32, #tpu.memory_space<vmem>>, vector<8x32xf32>
    %c0_1 = arith.constant 0 : index
    %c0_2 = arith.constant 0 : index
    %1 = vector.load %arg2[%c0_1, %c0_2] : memref<32x32xf32, #tpu.memory_space<vmem>>, vector<32x32xf32>
    %cst = arith.constant dense<0.000000e+00> : vector<8x32xf32>
    %2 = tpu.matmul %0, %1, %cst {dimension_numbers = #tpu.dot_dimension_numbers<[1], [1], [0], [0], [0, 0, 1, 0], [], []>} : vector<8x32xf32>, vector<32x32xf32>, vector<8x32xf32> -> vector<8x32xf32>
    %c0_3 = arith.constant 0 : index
    %c0_4 = arith.constant 0 : index
    %3 = vector.load %arg3[%c0_3, %c0_4] : memref<1x32xf32, #tpu.memory_space<vmem>>, vector<1x32xf32>
    %4 = vector.broadcast %3 : vector<1x32xf32> to vector<8x32xf32>
    %5 = arith.addf %2, %4 : vector<8x32xf32>
    %c0_5 = arith.constant 0 : index
    %c0_6 = arith.constant 0 : index
    %6 = vector.load %arg1[%c0_5, %c0_6] : memref<8x32xf32, #tpu.memory_space<vmem>>, vector<8x32xf32>
    %c0_7 = arith.constant 0 : index
    %c0_8 = arith.constant 0 : index
    %7 = vector.load %arg4[%c0_7, %c0_8] : memref<32x32xf32, #tpu.memory_space<vmem>>, vector<32x32xf32>
    %cst_9 = arith.constant dense<0.000000e+00> : vector<8x32xf32>
    %8 = tpu.matmul %6, %7, %cst_9 {dimension_numbers = #tpu.dot_dimension_numbers<[1], [1], [0], [0], [0, 0, 1, 0], [], []>} : vector<8x32xf32>, vector<32x32xf32>, vector<8x32xf32> -> vector<8x32xf32>
    %c0_10 = arith.constant 0 : index
    %c0_11 = arith.constant 0 : index
    %9 = vector.load %arg5[%c0_10, %c0_11] : memref<1x32xf32, #tpu.memory_space<vmem>>, vector<1x32xf32>
    %10 = vector.broadcast %9 : vector<1x32xf32> to vector<8x32xf32>
    %11 = arith.addf %8, %10 : vector<8x32xf32>
    %12 = arith.mulf %5, %5 : vector<8x32xf32>
    %cst_12 = arith.constant dense<0.000000e+00> : vector<8xf32>
    %13 = vector.multi_reduction <add>, %12, %cst_12 [1] : vector<8x32xf32> to vector<8xf32>
    %14 = vector.shape_cast %13 : vector<8xf32> to vector<8x1xf32>
    %cst_13 = arith.constant 1.000000e-24 : f32
    %15 = vector.broadcast %cst_13 : f32 to vector<8x1xf32>
    %16 = arith.maximumf %14, %15 : vector<8x1xf32>
    %17 = math.rsqrt %16 : vector<8x1xf32>
    %18 = vector.broadcast %17 : vector<8x1xf32> to vector<8x32xf32>
    %19 = arith.mulf %5, %18 : vector<8x32xf32>
    %20 = arith.mulf %11, %11 : vector<8x32xf32>
    %cst_14 = arith.constant dense<0.000000e+00> : vector<8xf32>
    %21 = vector.multi_reduction <add>, %20, %cst_14 [1] : vector<8x32xf32> to vector<8xf32>
    %22 = vector.shape_cast %21 : vector<8xf32> to vector<8x1xf32>
    %cst_15 = arith.constant 1.000000e-24 : f32
    %23 = vector.broadcast %cst_15 : f32 to vector<8x1xf32>
    %24 = arith.maximumf %22, %23 : vector<8x1xf32>
    %25 = math.rsqrt %24 : vector<8x1xf32>
    %26 = vector.broadcast %25 : vector<8x1xf32> to vector<8x32xf32>
    %27 = arith.mulf %11, %26 : vector<8x32xf32>
    %cst_16 = arith.constant 2.000000e+01 : f32
    %28 = vector.broadcast %cst_16 : f32 to vector<8x32xf32>
    %29 = arith.mulf %19, %28 : vector<8x32xf32>
    %cst_17 = arith.constant dense<0.000000e+00> : vector<8x8xf32>
    %30 = tpu.matmul %29, %27, %cst_17 {dimension_numbers = #tpu.dot_dimension_numbers<[1], [1], [0], [0], [0, 0, 1, 0], [], []>} : vector<8x32xf32>, vector<8x32xf32>, vector<8x8xf32> -> vector<8x8xf32>
    %cst_18 = arith.constant dense<0.000000e+00> : vector<8x8xf32>
    %31 = tpu.matmul %27, %29, %cst_18 {dimension_numbers = #tpu.dot_dimension_numbers<[1], [1], [0], [0], [0, 0, 1, 0], [], []>} : vector<8x32xf32>, vector<8x32xf32>, vector<8x8xf32> -> vector<8x8xf32>
    %cst_19 = arith.constant dense<0xFF800000> : vector<8xf32>
    %32 = vector.multi_reduction <maximumf>, %30, %cst_19 [1] : vector<8x8xf32> to vector<8xf32>
    %33 = vector.shape_cast %32 : vector<8xf32> to vector<8x1xf32>
    %34 = vector.broadcast %33 : vector<8x1xf32> to vector<8x8xf32>
    %35 = arith.subf %30, %34 : vector<8x8xf32>
    %36 = math.exp %35 : vector<8x8xf32>
    %cst_20 = arith.constant dense<0.000000e+00> : vector<8xf32>
    %37 = vector.multi_reduction <add>, %36, %cst_20 [1] : vector<8x8xf32> to vector<8xf32>
    %38 = vector.shape_cast %37 : vector<8xf32> to vector<8x1xf32>
    %39 = math.log %38 : vector<8x1xf32>
    %40 = arith.addf %33, %39 : vector<8x1xf32>
    %cst_21 = arith.constant dense<0xFF800000> : vector<8xf32>
    %41 = vector.multi_reduction <maximumf>, %31, %cst_21 [1] : vector<8x8xf32> to vector<8xf32>
    %42 = vector.shape_cast %41 : vector<8xf32> to vector<8x1xf32>
    %43 = vector.broadcast %42 : vector<8x1xf32> to vector<8x8xf32>
    %44 = arith.subf %31, %43 : vector<8x8xf32>
    %45 = math.exp %44 : vector<8x8xf32>
    %cst_22 = arith.constant dense<0.000000e+00> : vector<8xf32>
    %46 = vector.multi_reduction <add>, %45, %cst_22 [1] : vector<8x8xf32> to vector<8xf32>
    %47 = vector.shape_cast %46 : vector<8xf32> to vector<8x1xf32>
    %48 = math.log %47 : vector<8x1xf32>
    %49 = arith.addf %42, %48 : vector<8x1xf32>
    %50 = arith.mulf %29, %27 : vector<8x32xf32>
    %cst_23 = arith.constant dense<0.000000e+00> : vector<8xf32>
    %51 = vector.multi_reduction <add>, %50, %cst_23 [1] : vector<8x32xf32> to vector<8xf32>
    %52 = vector.shape_cast %51 : vector<8xf32> to vector<8x1xf32>
    %cst_24 = arith.constant dense<0.000000e+00> : vector<1xf32>
    %53 = vector.multi_reduction <add>, %52, %cst_24 [0] : vector<8x1xf32> to vector<1xf32>
    %54 = vector.shape_cast %53 : vector<1xf32> to vector<1x1xf32>
    %cst_25 = arith.constant 1.250000e-01 : f32
    %55 = vector.broadcast %cst_25 : f32 to vector<1x1xf32>
    %56 = arith.mulf %54, %55 : vector<1x1xf32>
    %cst_26 = arith.constant dense<0.000000e+00> : vector<1xf32>
    %57 = vector.multi_reduction <add>, %40, %cst_26 [0] : vector<8x1xf32> to vector<1xf32>
    %58 = vector.shape_cast %57 : vector<1xf32> to vector<1x1xf32>
    %cst_27 = arith.constant 1.250000e-01 : f32
    %59 = vector.broadcast %cst_27 : f32 to vector<1x1xf32>
    %60 = arith.mulf %58, %59 : vector<1x1xf32>
    %cst_28 = arith.constant dense<0.000000e+00> : vector<1xf32>
    %61 = vector.multi_reduction <add>, %49, %cst_28 [0] : vector<8x1xf32> to vector<1xf32>
    %62 = vector.shape_cast %61 : vector<1xf32> to vector<1x1xf32>
    %cst_29 = arith.constant 1.250000e-01 : f32
    %63 = vector.broadcast %cst_29 : f32 to vector<1x1xf32>
    %64 = arith.mulf %62, %63 : vector<1x1xf32>
    %cst_30 = arith.constant 0.000000e+00 : f32
    %65 = vector.broadcast %cst_30 : f32 to vector<1x1xf32>
    %66 = arith.subf %65, %56 : vector<1x1xf32>
    %67 = arith.addf %60, %64 : vector<1x1xf32>
    %cst_31 = arith.constant 5.000000e-01 : f32
    %68 = vector.broadcast %cst_31 : f32 to vector<1x1xf32>
    %69 = arith.mulf %68, %67 : vector<1x1xf32>
    %70 = arith.addf %66, %69 : vector<1x1xf32>
    %c0_32 = arith.constant 0 : index
    %c0_33 = arith.constant 0 : index
    %71 = vector.load %arg6[%c0_32, %c0_33] : memref<1x1xf32, #tpu.memory_space<vmem>>, vector<1x1xf32>
    tpu.vector_store %arg6[%c0_32, %c0_33], %70 {strides = array<i32>} : memref<1x1xf32, #tpu.memory_space<vmem>>, vector<1x1xf32>,
    return
  }
}

</mosaic_0001>

<llo_original>
// kernel: tpu_custom_call.1
$region0: #{tpu_custom_call.1}
  #allocation0 [shape = 'u32[]', space=smem, size = 0x4, offset = 0x4, fixed_abs, tag = 'smem constant byte address 0x4 - core index']
  #allocation1 [shape = 'u32[144,128]{1,0:T(1,128)}', space=vmem, size = 0x12000, scoped, tag = 'internal scratch']
  %s0 = inlined_call_operand.hbm [shape: f32[8,32], index: 0, kind: input, shape index: {}]
  %s1 = inlined_call_operand.hbm [shape: f32[8,32], index: 1, kind: input, shape index: {}]
  %s2 = inlined_call_operand.hbm [shape: f32[32,32], index: 2, kind: input, shape index: {}]
  %s3 = inlined_call_operand.vmem [shape: f32[1,32], index: 3, kind: input, shape index: {}]
  %s4 = inlined_call_operand.hbm [shape: f32[32,32], index: 4, kind: input, shape index: {}]
  %s5 = inlined_call_operand.vmem [shape: f32[1,32], index: 5, kind: input, shape index: {}]
  %s6 = inlined_call_operand.hbm [shape: f32[1,1], index: 6, kind: output, shape index: {}]
  %s7 = sld [smem:[#allocation0]]
  $region50: #{tpu_custom_call.1} parent=0
    _
  %s9 = ssub.s32 1, %s7
  %s10 = scalar_select 0, %s9, %s7
  $region1: #{tpu_custom_call.1} parent=0
    #allocation2 [shape = 'u8[4096]{0}', space=vmem, size = 0x1000, scoped, tag = 'input window, operand 0, single buffered']
    #allocation3 [shape = 's32[1]{0}', space=sflag, size = 0x4, scoped, tag = 'scoped memory for tpu_custom_call.1']
    #allocation4 [shape = 's32[1]{0}', space=sflag, size = 0x4, scoped, tag = 'scoped memory for tpu_custom_call.1']
    #allocation5 [shape = 'u8[4096]{0}', space=vmem, size = 0x1000, scoped, tag = 'input window, operand 1, single buffered']
    #allocation6 [shape = 's32[1]{0}', space=sflag, size = 0x4, scoped, tag = 'scoped memory for tpu_custom_call.1']
    #allocation7 [shape = 'u8[16384]{0}', space=vmem, size = 0x4000, scoped, tag = 'input window, operand 2, single buffered']
    #allocation8 [shape = 'u8[16384]{0}', space=vmem, size = 0x4000, scoped, tag = 'input window, operand 4, single buffered']
    #allocation9 [shape = 's32[1]{0}', space=sflag, size = 0x4, scoped, tag = 'scoped memory for tpu_custom_call.1']
    #allocation10 [shape = 'u8[512]{0}', space=vmem, size = 0x400, scoped, tag = 'output window, operand 0, single buffered']
    %11 = vsyncpa [#allocation3], 0
    %12 = vsyncpa [#allocation6], 0
    %13 = vsyncpa [#allocation9], 0
    %14 = vsyncpa [#allocation4], 0
    // Predicated region
    $region2: #{tpu_custom_call.1} parent=1 // pred_check
      _
    $region3: #{tpu_custom_call.1} parent=1 // pred_check_branch
      %16 = sbr.rel (0) target = $region5
    $region4: #{tpu_custom_call.1} parent=1 // pred_region
      %s18 = ssub.s32 128, 128
      %19 = vsyncadd [#allocation3], %s18
      %s21 = sshll.u32 [#allocation2], 4
      %s22 = int_to_ptr.vmem [resolvable:$true] %s21
      %24 = dma.hbm_to_vmem [thread:$0]  %s0, 128, %s22, [#allocation3]
    $region5: #{tpu_custom_call.1} parent=1 // pred_fallthru
      _
    // Predicated region
    $region6: #{tpu_custom_call.1} parent=1 // pred_check
      _
    $region7: #{tpu_custom_call.1} parent=1 // pred_check_branch
      %26 = sbr.rel (0) target = $region9
    $region8: #{tpu_custom_call.1} parent=1 // pred_region
      %s28 = ssub.s32 128, 128
      %29 = vsyncadd [#allocation6], %s28
      %s31 = sshll.u32 [#allocation5], 4
      %s32 = int_to_ptr.vmem [resolvable:$true] %s31
      %34 = dma.hbm_to_vmem [thread:$0]  %s1, 128, %s32, [#allocation6]
    $region9: #{tpu_custom_call.1} parent=1 // pred_fallthru
      _
    // Predicated region
    $region10: #{tpu_custom_call.1} parent=1 // pred_check
      _
    $region11: #{tpu_custom_call.1} parent=1 // pred_check_branch
      %36 = sbr.rel (0) target = $region13
    $region12: #{tpu_custom_call.1} parent=1 // pred_region
      %s38 = ssub.s32 512, 512
      %39 = vsyncadd [#allocation6], %s38
      %s40 = sshll.u32 [#allocation7], 4
      %s41 = int_to_ptr.vmem [resolvable:$true] %s40
      %46 = dma.hbm_to_vmem [thread:$0]  %s2, 512, %s41, [#allocation6], 128, 128, 8
    $region13: #{tpu_custom_call.1} parent=1 // pred_fallthru
      _
    // Predicated region
    $region14: #{tpu_custom_call.1} parent=1 // pred_check
      _
    $region15: #{tpu_custom_call.1} parent=1 // pred_check_branch
      %48 = sbr.rel (0) target = $region17
    $region16: #{tpu_custom_call.1} parent=1 // pred_region
      _
    $region17: #{tpu_custom_call.1} parent=1 // pred_fallthru
      _
    // Predicated region
    $region18: #{tpu_custom_call.1} parent=1 // pred_check
      _
    $region19: #{tpu_custom_call.1} parent=1 // pred_check_branch
      %50 = sbr.rel (0) target = $region21
    $region20: #{tpu_custom_call.1} parent=1 // pred_region
      %s52 = ssub.s32 512, 512
      %53 = vsyncadd [#allocation9], %s52
      %s54 = sshll.u32 [#allocation8], 4
      %s55 = int_to_ptr.vmem [resolvable:$true] %s54
      %60 = dma.hbm_to_vmem [thread:$0]  %s4, 512, %s55, [#allocation9], 128, 128, 8
    $region21: #{tpu_custom_call.1} parent=1 // pred_fallthru
      _
    // Predicated region
    $region22: #{tpu_custom_call.1} parent=1 // pred_check
      _
    $region23: #{tpu_custom_call.1} parent=1 // pred_check_branch
      %62 = sbr.rel (0) target = $region25
    $region24: #{tpu_custom_call.1} parent=1 // pred_region
      _
    $region25: #{tpu_custom_call.1} parent=1 // pred_fallthru
      _
    // Predicated region
    $region26: #{tpu_custom_call.1} parent=1 // pred_check
      _
    $region27: #{tpu_custom_call.1} parent=1 // pred_check_branch
      %64 = sbr.rel (0) target = $region29
    $region28: #{tpu_custom_call.1} parent=1 // pred_region
      %65 = dma.done [#allocation3], 128
    $region29: #{tpu_custom_call.1} parent=1 // pred_fallthru
      _
    // Predicated region
    $region30: #{tpu_custom_call.1} parent=1 // pred_check
      _
    $region31: #{tpu_custom_call.1} parent=1 // pred_check_branch
      %67 = sbr.rel (0) target = $region33
    $region32: #{tpu_custom_call.1} parent=1 // pred_region
      %68 = dma.done [#allocation6], 128
    $region33: #{tpu_custom_call.1} parent=1 // pred_fallthru
      _
    // Predicated region
    $region34: #{tpu_custom_call.1} parent=1 // pred_check
      _
    $region35: #{tpu_custom_call.1} parent=1 // pred_check_branch
      %70 = sbr.rel (0) target = $region37
    $region36: #{tpu_custom_call.1} parent=1 // pred_region
      %71 = dma.done [#allocation6], 512
    $region37: #{tpu_custom_call.1} parent=1 // pred_fallthru
      _
    // Predicated region
    $region38: #{tpu_custom_call.1} parent=1 // pred_check
      _
    $region39: #{tpu_custom_call.1} parent=1 // pred_check_branch
      %73 = sbr.rel (0) target = $region41
    $region40: #{tpu_custom_call.1} parent=1 // pred_region
      %74 = dma.done [#allocation9], 512
    $region41: #{tpu_custom_call.1} parent=1 // pred_fallthru
      _
    %v75 = vld [vmem:[#allocation2] sm:$0xff]
    %v76 = vld [vmem:[#allocation7] sm:$0xff]
    %v77 = vld [vmem:[#allocation7 + $0x8] sm:$0xff]
    %v78 = vld [vmem:[#allocation7 + $0x10] sm:$0xff]
    %v79 = vld [vmem:[#allocation7 + $0x18] sm:$0xff]
    %v80 = vld [vmem:[%s3] sm:$0x1]
    %v82 = vlaneseq
    %v83 = vshrl.u32 %v82, 7
    %v84 = vsub.s32 0, %v83
    %v85 = vrot.slane %v80, %v84
    %vm87 = vcmask 261120
    %v89 = vsel %vm87, %v75, 0
    %v92 = vsel %vm87, %v76, 0
    %v95 = vsel %vm87, %v77, 0
    %v98 = vsel %vm87, %v78, 0
    %v101 = vsel %vm87, %v79, 0
    %103 = vmatprep.subr.mxu0 0.0
    %104 = vmatpush1.xpose.msra.mxu0 %v92
    %105 = vmatprep.subr.mxu0 0.0
    %106 = vmatpush1.xpose.msra.mxu0 %v95
    %107 = vmatprep.subr.mxu0 0.0
    %108 = vmatpush1.xpose.msra.mxu0 %v98
    %109 = vmatprep.subr.mxu0 0.0
    %110 = vmatpush1.xpose.msra.mxu0 %v101
    %111 = vmatprep.subr.mxu0 0.0
    %112 = vmatpush1.xpose.msra.mxu0 0.0
    %113 = vmatprep.subr.mxu0 0.0
    %114 = vmatpush1.xpose.msra.mxu0 0.0
    %115 = vmatprep.subr.mxu0 0.0
    %116 = vmatpush1.xpose.msra.mxu0 0.0
    %117 = vmatprep.subr.mxu0 0.0
    %118 = vmatpush1.xpose.msra.mxu0 0.0
    %119 = vmatprep.subr.mxu0 0.0
    %120 = vmatpush1.xpose.msra.mxu0 0.0
    %121 = vmatprep.subr.mxu0 0.0
    %122 = vmatpush1.xpose.msra.mxu0 0.0
    %123 = vmatprep.subr.mxu0 0.0
    %124 = vmatpush1.xpose.msra.mxu0 0.0
    %125 = vmatprep.subr.mxu0 0.0
    %126 = vmatpush1.xpose.msra.mxu0 0.0
    %127 = vmatprep.subr.mxu0 0.0
    %128 = vmatpush1.xpose.msra.mxu0 0.0
    %129 = vmatprep.subr.mxu0 0.0
    %130 = vmatpush1.xpose.msra.mxu0 0.0
    %131 = vmatprep.subr.mxu0 0.0
    %132 = vmatpush1.xpose.msra.mxu0 0.0
    %133 = vmatprep.subr.mxu0 0.0
    %134 = vmatpush1.xpose.msra.mxu0 0.0
    %135 = vmatprep.subr.mxu0 0.0
    %136 = vmatpush1.xpose.msra.mxu0 0.0
    %137 = vmatprep.subr.mxu0 0.0
    %138 = vmatpush1.xpose.msra.mxu0 0.0
    %139 = vmatprep.subr.mxu0 0.0
    %140 = vmatpush1.xpose.msra.mxu0 0.0
    %141 = vmatprep.subr.mxu0 0.0
    %142 = vmatpush1.xpose.msra.mxu0 0.0
    %143 = vmatprep.subr.mxu0 0.0
    %144 = vmatpush1.xpose.msra.mxu0 0.0
    %145 = vmatprep.subr.mxu0 0.0
    %146 = vmatpush1.xpose.msra.mxu0 0.0
    %147 = vmatprep.subr.mxu0 0.0
    %148 = vmatpush1.xpose.msra.mxu0 0.0
    %149 = vmatprep.subr.mxu0 0.0
    %150 = vmatpush1.xpose.msra.mxu0 0.0
    %151 = vmatprep.subr.mxu0 0.0
    %152 = vmatpush1.xpose.msra.mxu0 0.0
    %153 = vmatprep.subr.mxu0 0.0
    %154 = vmatpush1.xpose.msra.mxu0 0.0
    %155 = vmatprep.subr.mxu0 0.0
    %156 = vmatpush1.xpose.msra.mxu0 0.0
    %157 = vmatprep.subr.mxu0 0.0
    %158 = vmatpush1.xpose.msra.mxu0 0.0
    %159 = vmatprep.subr.mxu0 0.0
    %160 = vmatpush1.xpose.msra.mxu0 0.0
    %161 = vmatprep.subr.mxu0 0.0
    %162 = vmatpush1.xpose.msra.mxu0 0.0
    %163 = vmatprep.subr.mxu0 0.0
    %164 = vmatpush1.xpose.msra.mxu0 0.0
    %165 = vmatprep.subr.mxu0 0.0
    %166 = vmatpush1.xpose.msra.mxu0 0.0
    %167 = vmatprep.mubr.f32.mxu0 0.0
    %168 = vmatmul.mubr.f32.gmra.mrb[0].mxu0 %v89
    %v169 = vpop.f32.mrb[0].mxu0
    %v170 = vadd.f32 %v85, %v169
    %v171 = vpop.f32.mrb[0].mxu0
    %172 = vdwg.mxu0
    %v173 = vld [vmem:[#allocation5] sm:$0xff]
    %v174 = vld [vmem:[#allocation8] sm:$0xff]
    %v175 = vld [vmem:[#allocation8 + $0x8] sm:$0xff]
    %v176 = vld [vmem:[#allocation8 + $0x10] sm:$0xff]
    %v177 = vld [vmem:[#allocation8 + $0x18] sm:$0xff]
    %v178 = vld [vmem:[%s5] sm:$0x1]
    %v180 = vlaneseq
    %v181 = vshrl.u32 %v180, 7
    %v182 = vsub.s32 0, %v181
    %v183 = vrot.slane %v178, %v182
    %v186 = vsel %vm87, %v173, 0
    %v189 = vsel %vm87, %v174, 0
    %v192 = vsel %vm87, %v175, 0
    %v195 = vsel %vm87, %v176, 0
    %v198 = vsel %vm87, %v177, 0
    %200 = vmatprep.subr.mxu0 0.0
    %201 = vmatpush1.xpose.msra.mxu0 %v189
    %202 = vmatprep.subr.mxu0 0.0
    %203 = vmatpush1.xpose.msra.mxu0 %v192
    %204 = vmatprep.subr.mxu0 0.0
    %205 = vmatpush1.xpose.msra.mxu0 %v195
    %206 = vmatprep.subr.mxu0 0.0
    %207 = vmatpush1.xpose.msra.mxu0 %v198
    %208 = vmatprep.subr.mxu0 0.0
    %209 = vmatpush1.xpose.msra.mxu0 0.0
    %210 = vmatprep.subr.mxu0 0.0
    %211 = vmatpush1.xpose.msra.mxu0 0.0
    %212 = vmatprep.subr.mxu0 0.0
    %213 = vmatpush1.xpose.msra.mxu0 0.0
    %214 = vmatprep.subr.mxu0 0.0
    %215 = vmatpush1.xpose.msra.mxu0 0.0
    %216 = vmatprep.subr.mxu0 0.0
    %217 = vmatpush1.xpose.msra.mxu0 0.0
    %218 = vmatprep.subr.mxu0 0.0
    %219 = vmatpush1.xpose.msra.mxu0 0.0
    %220 = vmatprep.subr.mxu0 0.0
    %221 = vmatpush1.xpose.msra.mxu0 0.0
    %222 = vmatprep.subr.mxu0 0.0
    %223 = vmatpush1.xpose.msra.mxu0 0.0
    %224 = vmatprep.subr.mxu0 0.0
    %225 = vmatpush1.xpose.msra.mxu0 0.0
    %226 = vmatprep.subr.mxu0 0.0
    %227 = vmatpush1.xpose.msra.mxu0 0.0
    %228 = vmatprep.subr.mxu0 0.0
    %229 = vmatpush1.xpose.msra.mxu0 0.0
    %230 = vmatprep.subr.mxu0 0.0
    %231 = vmatpush1.xpose.msra.mxu0 0.0
    %232 = vmatprep.subr.mxu0 0.0
    %233 = vmatpush1.xpose.msra.mxu0 0.0
    %234 = vmatprep.subr.mxu0 0.0
    %235 = vmatpush1.xpose.msra.mxu0 0.0
    %236 = vmatprep.subr.mxu0 0.0
    %237 = vmatpush1.xpose.msra.mxu0 0.0
    %238 = vmatprep.subr.mxu0 0.0
    %239 = vmatpush1.xpose.msra.mxu0 0.0
    %240 = vmatprep.subr.mxu0 0.0
    %241 = vmatpush1.xpose.msra.mxu0 0.0
    %242 = vmatprep.subr.mxu0 0.0
    %243 = vmatpush1.xpose.msra.mxu0 0.0
    %244 = vmatprep.subr.mxu0 0.0
    %245 = vmatpush1.xpose.msra.mxu0 0.0
    %246 = vmatprep.subr.mxu0 0.0
    %247 = vmatpush1.xpose.msra.mxu0 0.0
    %248 = vmatprep.subr.mxu0 0.0
    %249 = vmatpush1.xpose.msra.mxu0 0.0
    %250 = vmatprep.subr.mxu0 0.0
    %251 = vmatpush1.xpose.msra.mxu0 0.0
    %252 = vmatprep.subr.mxu0 0.0
    %253 = vmatpush1.xpose.msra.mxu0 0.0
    %254 = vmatprep.subr.mxu0 0.0
    %255 = vmatpush1.xpose.msra.mxu0 0.0
    %256 = vmatprep.subr.mxu0 0.0
    %257 = vmatpush1.xpose.msra.mxu0 0.0
    %258 = vmatprep.subr.mxu0 0.0
    %259 = vmatpush1.xpose.msra.mxu0 0.0
    %260 = vmatprep.subr.mxu0 0.0
    %261 = vmatpush1.xpose.msra.mxu0 0.0
    %262 = vmatprep.subr.mxu0 0.0
    %263 = vmatpush1.xpose.msra.mxu0 0.0
    %264 = vmatprep.mubr.f32.mxu0 0.0
    %265 = vmatmul.mubr.f32.gmra.mrb[0].mxu0 %v186
    %v266 = vpop.f32.mrb[0].mxu0
    %v267 = vadd.f32 %v183, %v266
    %v268 = vpop.f32.mrb[0].mxu0
    %269 = vdwg.mxu0
    %v270 = vmul.f32 %v170, %v170
    %v271 = vsel %vm87, %v270, 0.0
    %272 = vadd.xlane.f32.xlu0 %v271
    %v273 = vpop.xlane.xlu0 %272
    %v274 = vmax.f32 %v273, 1e-24
    %v275 = vrsqrt.pop %v274
    %v276 = vmul.f32 %v170, %v275
    %v277 = vmul.f32 %v267, %v267
    %v278 = vsel %vm87, %v277, 0.0
    %279 = vadd.xlane.f32.xlu0 %v278
    %v280 = vpop.xlane.xlu0 %279
    %v281 = vmax.f32 %v280, 1e-24
    %v282 = vrsqrt.pop %v281
    %v283 = vmul.f32 %v267, %v282
    %v284 = vmul.f32 %v276, 20.0
    %v286 = vsel %vm87, %v284, 0
    %v289 = vsel %vm87, %v283, 0
    %291 = vmatprep.subr.mxu0 0.0
    %292 = vmatpush1.xpose.msra.mxu0 %v289
    %293 = vmatprep.subr.mxu0 0.0
    %294 = vmatpush1.xpose.msra.mxu0 0.0
    %295 = vmatprep.subr.mxu0 0.0
    %296 = vmatpush1.xpose.msra.mxu0 0.0
    %297 = vmatprep.subr.mxu0 0.0
    %298 = vmatpush1.xpose.msra.mxu0 0.0
    %299 = vmatprep.subr.mxu0 0.0
    %300 = vmatpush1.xpose.msra.mxu0 0.0
    %301 = vmatprep.subr.mxu0 0.0
    %302 = vmatpush1.xpose.msra.mxu0 0.0
    %303 = vmatprep.subr.mxu0 0.0
    %304 = vmatpush1.xpose.msra.mxu0 0.0
    %305 = vmatprep.subr.mxu0 0.0
    %306 = vmatpush1.xpose.msra.mxu0 0.0
    %307 = vmatprep.subr.mxu0 0.0
    %308 = vmatpush1.xpose.msra.mxu0 0.0
    %309 = vmatprep.subr.mxu0 0.0
    %310 = vmatpush1.xpose.msra.mxu0 0.0
    %311 = vmatprep.subr.mxu0 0.0
    %312 = vmatpush1.xpose.msra.mxu0 0.0
    %313 = vmatprep.subr.mxu0 0.0
    %314 = vmatpush1.xpose.msra.mxu0 0.0
    %315 = vmatprep.subr.mxu0 0.0
    %316 = vmatpush1.xpose.msra.mxu0 0.0
    %317 = vmatprep.subr.mxu0 0.0
    %318 = vmatpush1.xpose.msra.mxu0 0.0
    %319 = vmatprep.subr.mxu0 0.0
    %320 = vmatpush1.xpose.msra.mxu0 0.0
    %321 = vmatprep.subr.mxu0 0.0
    %322 = vmatpush1.xpose.msra.mxu0 0.0
    %323 = vmatprep.subr.mxu0 0.0
    %324 = vmatpush1.xpose.msra.mxu0 0.0
    %325 = vmatprep.subr.mxu0 0.0
    %326 = vmatpush1.xpose.msra.mxu0 0.0
    %327 = vmatprep.subr.mxu0 0.0
    %328 = vmatpush1.xpose.msra.mxu0 0.0
    %329 = vmatprep.subr.mxu0 0.0
    %330 = vmatpush1.xpose.msra.mxu0 0.0
    %331 = vmatprep.subr.mxu0 0.0
    %332 = vmatpush1.xpose.msra.mxu0 0.0
    %333 = vmatprep.subr.mxu0 0.0
    %334 = vmatpush1.xpose.msra.mxu0 0.0
    %335 = vmatprep.subr.mxu0 0.0
    %336 = vmatpush1.xpose.msra.mxu0 0.0
    %337 = vmatprep.subr.mxu0 0.0
    %338 = vmatpush1.xpose.msra.mxu0 0.0
    %339 = vmatprep.subr.mxu0 0.0
    %340 = vmatpush1.xpose.msra.mxu0 0.0
    %341 = vmatprep.subr.mxu0 0.0
    %342 = vmatpush1.xpose.msra.mxu0 0.0
    %343 = vmatprep.subr.mxu0 0.0
    %344 = vmatpush1.xpose.msra.mxu0 0.0
    %345 = vmatprep.subr.mxu0 0.0
    %346 = vmatpush1.xpose.msra.mxu0 0.0
    %347 = vmatprep.subr.mxu0 0.0
    %348 = vmatpush1.xpose.msra.mxu0 0.0
    %349 = vmatprep.subr.mxu0 0.0
    %350 = vmatpush1.xpose.msra.mxu0 0.0
    %351 = vmatprep.subr.mxu0 0.0
    %352 = vmatpush1.xpose.msra.mxu0 0.0
    %353 = vmatprep.subr.mxu0 0.0
    %354 = vmatpush1.xpose.msra.mxu0 0.0
    %355 = vmatprep.mubr.f32.mxu0 0.0
    %356 = vmatmul.mubr.f32.gmra.mrb[0].mxu0 %v286
    %v357 = vpop.f32.mrb[0].mxu0
    %v358 = vadd.f32 0.0, %v357
    %v359 = vpop.f32.mrb[0].mxu0
    %360 = vdwg.mxu0
    %361 = vmatprep.subr.mxu0 0.0
    %362 = vmatpush1.xpose.msra.mxu0 %v286
    %363 = vmatprep.subr.mxu0 0.0
    %364 = vmatpush1.xpose.msra.mxu0 0.0
    %365 = vmatprep.subr.mxu0 0.0
    %366 = vmatpush1.xpose.msra.mxu0 0.0
    %367 = vmatprep.subr.mxu0 0.0
    %368 = vmatpush1.xpose.msra.mxu0 0.0
    %369 = vmatprep.subr.mxu0 0.0
    %370 = vmatpush1.xpose.msra.mxu0 0.0
    %371 = vmatprep.subr.mxu0 0.0
    %372 = vmatpush1.xpose.msra.mxu0 0.0
    %373 = vmatprep.subr.mxu0 0.0
    %374 = vmatpush1.xpose.msra.mxu0 0.0
    %375 = vmatprep.subr.mxu0 0.0
    %376 = vmatpush1.xpose.msra.mxu0 0.0
    %377 = vmatprep.subr.mxu0 0.0
    %378 = vmatpush1.xpose.msra.mxu0 0.0
    %379 = vmatprep.subr.mxu0 0.0
    %380 = vmatpush1.xpose.msra.mxu0 0.0
    %381 = vmatprep.subr.mxu0 0.0
    %382 = vmatpush1.xpose.msra.mxu0 0.0
    %383 = vmatprep.subr.mxu0 0.0
    %384 = vmatpush1.xpose.msra.mxu0 0.0
    %385 = vmatprep.subr.mxu0 0.0
    %386 = vmatpush1.xpose.msra.mxu0 0.0
    %387 = vmatprep.subr.mxu0 0.0
    %388 = vmatpush1.xpose.msra.mxu0 0.0
    %389 = vmatprep.subr.mxu0 0.0
    %390 = vmatpush1.xpose.msra.mxu0 0.0
    %391 = vmatprep.subr.mxu0 0.0
    %392 = vmatpush1.xpose.msra.mxu0 0.0
    %393 = vmatprep.subr.mxu0 0.0
    %394 = vmatpush1.xpose.msra.mxu0 0.0
    %395 = vmatprep.subr.mxu0 0.0
    %396 = vmatpush1.xpose.msra.mxu0 0.0
    %397 = vmatprep.subr.mxu0 0.0
    %398 = vmatpush1.xpose.msra.mxu0 0.0
    %399 = vmatprep.subr.mxu0 0.0
    %400 = vmatpush1.xpose.msra.mxu0 0.0
    %401 = vmatprep.subr.mxu0 0.0
    %402 = vmatpush1.xpose.msra.mxu0 0.0
    %403 = vmatprep.subr.mxu0 0.0
    %404 = vmatpush1.xpose.msra.mxu0 0.0
    %405 = vmatprep.subr.mxu0 0.0
    %406 = vmatpush1.xpose.msra.mxu0 0.0
    %407 = vmatprep.subr.mxu0 0.0
    %408 = vmatpush1.xpose.msra.mxu0 0.0
    %409 = vmatprep.subr.mxu0 0.0
    %410 = vmatpush1.xpose.msra.mxu0 0.0
    %411 = vmatprep.subr.mxu0 0.0
    %412 = vmatpush1.xpose.msra.mxu0 0.0
    %413 = vmatprep.subr.mxu0 0.0
    %414 = vmatpush1.xpose.msra.mxu0 0.0
    %415 = vmatprep.subr.mxu0 0.0
    %416 = vmatpush1.xpose.msra.mxu0 0.0
    %417 = vmatprep.subr.mxu0 0.0
    %418 = vmatpush1.xpose.msra.mxu0 0.0
    %419 = vmatprep.subr.mxu0 0.0
    %420 = vmatpush1.xpose.msra.mxu0 0.0
    %421 = vmatprep.subr.mxu0 0.0
    %422 = vmatpush1.xpose.msra.mxu0 0.0
    %423 = vmatprep.subr.mxu0 0.0
    %424 = vmatpush1.xpose.msra.mxu0 0.0
    %425 = vmatprep.mubr.f32.mxu0 0.0
    %426 = vmatmul.mubr.f32.gmra.mrb[0].mxu0 %v289
    %v427 = vpop.f32.mrb[0].mxu0
    %v428 = vadd.f32 0.0, %v427
    %v429 = vpop.f32.mrb[0].mxu0
    %430 = vdwg.mxu0
    %vm431 = vcmask 64512
    %v432 = vsel %vm431, %v358, -inf
    %433 = vmax.xlane.f32.xlu0 %v432
    %v434 = vpop.xlane.xlu0 %433
    %v435 = vsub.f32 %v358, %v434
    %v436 = vmul.f32 %v435, 1.442695
    %v437 = vpow.pop %v436
    %v438 = vsel %vm431, %v437, 0.0
    %439 = vadd.xlane.f32.xlu0 %v438
    %v440 = vpop.xlane.xlu0 %439
    %v441 = vlog2.pop %v440
    %v442 = vmul.f32 %v441, 0.6931472
    %v443 = vadd.f32 %v434, %v442
    %v444 = vsel %vm431, %v428, -inf
    %445 = vmax.xlane.f32.xlu0 %v444
    %v446 = vpop.xlane.xlu0 %445
    %v447 = vsub.f32 %v428, %v446
    %v448 = vmul.f32 %v447, 1.442695
    %v449 = vpow.pop %v448
    %v450 = vsel %vm431, %v449, 0.0
    %451 = vadd.xlane.f32.xlu0 %v450
    %v452 = vpop.xlane.xlu0 %451
    %v453 = vlog2.pop %v452
    %v454 = vmul.f32 %v453, 0.6931472
    %v455 = vadd.f32 %v446, %v454
    %v456 = vmul.f32 %v284, %v283
    %v457 = vsel %vm87, %v456, 0.0
    %458 = vadd.xlane.f32.xlu0 %v457
    %v459 = vpop.xlane.xlu0 %458
    %v460 = vrot.slane %v459, 4
    %v461 = vadd.f32 %v459, %v460
    %v462 = vrot.slane %v461, 2
    %v463 = vadd.f32 %v461, %v462
    %v464 = vrot.slane %v463, 1
    %v465 = vadd.f32 %v463, %v464
    %v466 = vmul.f32 %v465, 0.125
    %v467 = vrot.slane %v443, 4
    %v468 = vadd.f32 %v443, %v467
    %v469 = vrot.slane %v468, 2
    %v470 = vadd.f32 %v468, %v469
    %v471 = vrot.slane %v470, 1
    %v472 = vadd.f32 %v470, %v471
    %v473 = vmul.f32 %v472, 0.125
    %v474 = vrot.slane %v455, 4
    %v475 = vadd.f32 %v455, %v474
    %v476 = vrot.slane %v475, 2
    %v477 = vadd.f32 %v475, %v476
    %v478 = vrot.slane %v477, 1
    %v479 = vadd.f32 %v477, %v478
    %v480 = vmul.f32 %v479, 0.125
    %v481 = vsub.f32 0.0, %v466
    %v482 = vadd.f32 %v473, %v480
    %v483 = vmul.f32 %v482, 0.5
    %v484 = vadd.f32 %v481, %v483
    %vm485 = vcmask 0
    %486 = vst.msk [vmem:[#allocation10] sm:$0x1] %vm485, %v484
    // Predicated region
    $region42: #{tpu_custom_call.1} parent=1 // pred_check
      _
    $region43: #{tpu_custom_call.1} parent=1 // pred_check_branch
      %488 = sbr.rel (0) target = $region45
    $region44: #{tpu_custom_call.1} parent=1 // pred_region
      %s490 = ssub.s32 16, 16
      %491 = vsyncadd [#allocation4], %s490
      %s493 = sshll.u32 [#allocation10], 4
      %s494 = int_to_ptr.vmem [resolvable:$true] %s493
      %496 = dma.vmem_to_hbm [thread:$0]  %s494, 16, %s6, [#allocation4]
    $region45: #{tpu_custom_call.1} parent=1 // pred_fallthru
      _
    // Predicated region
    $region46: #{tpu_custom_call.1} parent=1 // pred_check
      _
    $region47: #{tpu_custom_call.1} parent=1 // pred_check_branch
      %498 = sbr.rel (0) target = $region49
    $region48: #{tpu_custom_call.1} parent=1 // pred_region
      %499 = dma.done [#allocation4], 16
    $region49: #{tpu_custom_call.1} parent=1 // pred_fallthru
      _
    %500 = vsyncpa [#allocation3], 1
    %501 = vsyncpa [#allocation6], 1
    %502 = vsyncpa [#allocation9], 1
    %503 = vsyncpa [#allocation4], 1

</llo_original>
